<compile_context>
chip_gen: v7x
topology: tpu7x:2x2x1
jax: 0.10.0
libtpu: 0.0.40
codegen_flags: <defaults>
</compile_context>

<pallas_src>
import functools

import jax
import jax.numpy as jnp
from jax.experimental import pallas as pl
from jax.experimental.pallas import tpu as pltpu


# ----------------------------------------------------------------------------
# Pallas kernel: fused global-average-pool (reduction over HW) + 1x1 conv
# ----------------------------------------------------------------------------
def _classify_kernel(x_ref, w_ref, b_ref, o_ref, acc_ref, *, inv_hw, add_bias):
    # x_ref:   (TB, C1, THW)  input block (HW on the lane axis -> dense loads)
    # w_ref:   (C1, C2)       1x1 conv weight as a matmul matrix
    # b_ref:   (1, C2)        conv bias
    # o_ref:   (TB, C2)       flattened output block
    # acc_ref: (TB, C1) f32   running spatial sum (persists across the HW axis)
    s = pl.program_id(1)

    @pl.when(s == 0)
    def _init():
        acc_ref[...] = jnp.zeros_like(acc_ref)

    # Partial spatial sum for this HW tile (cross-lane reduce on the XLU).
    acc_ref[...] += jnp.sum(x_ref[...].astype(jnp.float32), axis=-1)

    @pl.when(s == pl.num_programs(1) - 1)
    def _finalize():
        pooled = acc_ref[...] * inv_hw                               # (TB, C1)
        y = jnp.dot(pooled, w_ref[...], preferred_element_type=jnp.float32)
        if add_bias:
            y = y + b_ref[...]
        o_ref[...] = y.astype(o_ref.dtype)


# ----------------------------------------------------------------------------
# Tile-size selection
# ----------------------------------------------------------------------------
def _choose_batch_tile(b):
    if b % 8 != 0:
        return b          # full-dim block satisfies the tiling rule
    tb = min(b, 64)
    while b % tb != 0:
        tb -= 8
    return tb


def _choose_hw_tile(hw, tb, c1, itemsize, budget_bytes=8 << 20):
    # One input block must stay well under the scoped-VMEM budget (x2 for
    # double buffering).  Lane axis (last dim) must be a multiple of 128 or
    # the full extent.
    if hw % 128 != 0:
        return hw
    max_thw = budget_bytes // max(1, tb * c1 * itemsize)
    max_thw = max(128, (max_thw // 128) * 128)
    thw = min(hw, max_thw)
    while hw % thw != 0:
        thw -= 128
    return thw


# ----------------------------------------------------------------------------
# Pallas wrapper: pooled(x) @ W (+ bias)
# ----------------------------------------------------------------------------
def classify_pool_linear(x_bchw, w_mat, bias, *, add_bias=True):
    B, C1, H, W = x_bchw.shape
    HW = H * W
    C2 = w_mat.shape[1]

    x3 = x_bchw.reshape(B, C1, HW)               # HW on the lane axis
    w_mat = w_mat.astype(jnp.float32)
    b2 = bias.reshape(1, C2).astype(jnp.float32)

    TB = _choose_batch_tile(B)
    THW = _choose_hw_tile(HW, TB, C1, x3.dtype.itemsize)
    grid = (B // TB, HW // THW)

    kern = functools.partial(_classify_kernel, inv_hw=1.0 / HW, add_bias=add_bias)

    return pl.pallas_call(
        kern,
        out_shape=jax.ShapeDtypeStruct((B, C2), x_bchw.dtype),
        grid_spec=pltpu.PrefetchScalarGridSpec(
            num_scalar_prefetch=0,
            grid=grid,
            in_specs=[
                pl.BlockSpec((TB, C1, THW), lambda b, s: (b, 0, s)),
                pl.BlockSpec((C1, C2), lambda b, s: (0, 0)),
                pl.BlockSpec((1, C2), lambda b, s: (0, 0)),
            ],
            out_specs=pl.BlockSpec((TB, C2), lambda b, s: (b, 0)),
            scratch_shapes=[pltpu.VMEM((TB, C1), jnp.float32)],
        ),
        compiler_params=pltpu.CompilerParams(
            dimension_semantics=("parallel", "arbitrary"),
            vmem_limit_bytes=32 * 1024 * 1024,
        ),
        cost_estimate=pl.CostEstimate(
            flops=int(B * C1 * HW + 2 * B * C1 * C2),
            transcendentals=0,
            bytes_accessed=int(x3.size * x3.dtype.itemsize
                               + w_mat.size * 4 + C2 * 4
                               + B * C2 * x_bchw.dtype.itemsize),
        ),
    )(x3, w_mat, b2)


# ----------------------------------------------------------------------------
# Module forward:  Classify(x) = Flatten(Conv1x1(cat([AAP(y) for y in xs], 1)))
# ----------------------------------------------------------------------------
def classify_forward(x, params):
    xs = x if isinstance(x, (list, tuple)) else [x]
    w = params['w']                              # (C2, C1_total, 1, 1)
    bias = params['b']                           # (C2,)
    C2 = w.shape[0]
    wmat = w.reshape(C2, -1).T                   # (C1_total, C2)

    # cat-then-conv == sum over per-input row slices of the weight matrix.
    out = None
    off = 0
    for i, xi in enumerate(xs):
        ci = xi.shape[1]
        part = classify_pool_linear(xi, wmat[off:off + ci], bias,
                                    add_bias=(i == 0))
        out = part if out is None else out + part
        off += ci
    return out                                   # (B, C2) — already flattened


# ----------------------------------------------------------------------------
# Deterministic parameter initialization (synthetic, no checkpoint load)
# ----------------------------------------------------------------------------
def init_classify_params(key, c1, c2):
    kw, kb = jax.random.split(key)
    fan_in = c1
    w = jax.random.normal(kw, (c2, c1, 1, 1), jnp.float32) / jnp.sqrt(fan_in)
    b = 0.1 * jax.random.normal(kb, (c2,), jnp.float32)
    return dict(w=w, b=b)


def classify_ref(x, params):
    xs = x if isinstance(x, (list, tuple)) else [x]
    pooled = jnp.concatenate([jnp.mean(xi, axis=(2, 3)) for xi in xs], axis=1)
    w2 = params['w'].reshape(params['w'].shape[0], -1)
    return pooled @ w2.T + params['b']


if __name__ == "__main__":
    key = jax.random.PRNGKey(0)
    kx, kx2, kp = jax.random.split(key, 3)

    B, C1, H, W = 2, 4, 16, 16
    C2 = 8
    x = jax.random.normal(kx, (B, C1, H, W), jnp.float32)        # NCHW input
    params = init_classify_params(kp, C1, C2)

    out = jax.jit(classify_forward)(x, params)
    jax.block_until_ready(out)
    assert out.shape == (B, C2)
    assert jnp.all(jnp.isfinite(out))
    assert jnp.allclose(out, classify_ref(x, params), atol=1e-4, rtol=1e-4)

    # List-input path (torch.cat of pooled features along channels).
    x_b = jax.random.normal(kx2, (B, C1, H // 2, W // 2), jnp.float32)
    params2 = init_classify_params(kp, 2 * C1, C2)
    out2 = classify_forward([x, x_b], params2)
    jax.block_until_ready(out2)
    assert out2.shape == (B, C2)
    assert jnp.allclose(out2, classify_ref([x, x_b], params2), atol=1e-4, rtol=1e-4)

    print("KERNEL_OK")
</pallas_src>

<mosaic_0001>
module attributes {stable_mosaic.version = 11 : i64} {
  func.func @_classify_kernel(%arg0: i32, %arg1: i32, %arg2: memref<2x4x256xf32, #tpu.memory_space<vmem>>, %arg3: memref<4x8xf32, #tpu.memory_space<vmem>>, %arg4: memref<1x8xf32, #tpu.memory_space<vmem>>, %arg5: memref<2x8xf32, #tpu.memory_space<vmem>>, %arg6: memref<2x4xf32, #tpu.memory_space<vmem>>) attributes {dimension_semantics = [#tpu.dimension_semantics<parallel>, #tpu.dimension_semantics<arbitrary>], iteration_bounds = array<i64: 1, 1>, scalar_prefetch = 0 : i64, scratch_operands = 1 : i64, tpu.core_type = #tpu.core_type<tc>, window_params = [{transform_indices = @transform_0, window_bounds = array<i64: 2, 4, 256>}, {pipeline_mode = #tpu.pipeline_mode<synchronous>, transform_indices = @transform_1, window_bounds = array<i64: 4, 8>}, {pipeline_mode = #tpu.pipeline_mode<synchronous>, transform_indices = @transform_2, window_bounds = array<i64: 1, 8>}, {transform_indices = @transform_3, window_bounds = array<i64: 2, 8>}]} {
    %c0_i32 = arith.constant 0 : i32
    %0 = arith.cmpi eq, %arg1, %c0_i32 : i32
    %1 = arith.extui %0 : i1 to i32
    %c0_i32_0 = arith.constant 0 : i32
    %2 = arith.cmpi ne, %1, %c0_i32_0 : i32
    scf.if %2 {
      %cst_9 = arith.constant 0.000000e+00 : f32
      %11 = vector.broadcast %cst_9 : f32 to vector<2x4xf32>
      %c0_10 = arith.constant 0 : index
      %c0_11 = arith.constant 0 : index
      %12 = vector.load %arg6[%c0_10, %c0_11] : memref<2x4xf32, #tpu.memory_space<vmem>>, vector<2x4xf32>
      tpu.vector_store %arg6[%c0_10, %c0_11], %11 {strides = array<i32>} : memref<2x4xf32, #tpu.memory_space<vmem>>, vector<2x4xf32>,
    } else {
    }
    %c0 = arith.constant 0 : index
    %c0_1 = arith.constant 0 : index
    %3 = vector.load %arg6[%c0, %c0_1] : memref<2x4xf32, #tpu.memory_space<vmem>>, vector<2x4xf32>
    %c0_2 = arith.constant 0 : index
    %c0_3 = arith.constant 0 : index
    %c0_4 = arith.constant 0 : index
    %4 = vector.load %arg2[%c0_2, %c0_3, %c0_4] : memref<2x4x256xf32, #tpu.memory_space<vmem>>, vector<2x4x256xf32>
    %cst = arith.constant dense<0.000000e+00> : vector<2x4xf32>
    %5 = vector.multi_reduction <add>, %4, %cst [2] : vector<2x4x256xf32> to vector<2x4xf32>
    %6 = arith.addf %3, %5 : vector<2x4xf32>
    %c0_5 = arith.constant 0 : index
    %c0_6 = arith.constant 0 : index
    %7 = vector.load %arg6[%c0_5, %c0_6] : memref<2x4xf32, #tpu.memory_space<vmem>>, vector<2x4xf32>
    tpu.vector_store %arg6[%c0_5, %c0_6], %6 {strides = array<i32>} : memref<2x4xf32, #tpu.memory_space<vmem>>, vector<2x4xf32>,
    %c0_i32_7 = arith.constant 0 : i32
    %8 = arith.cmpi eq, %arg1, %c0_i32_7 : i32
    %9 = arith.extui %8 : i1 to i32
    %c0_i32_8 = arith.constant 0 : i32
    %10 = arith.cmpi ne, %9, %c0_i32_8 : i32
    scf.if %10 {
      %c0_9 = arith.constant 0 : index
      %c0_10 = arith.constant 0 : index
      %11 = vector.load %arg6[%c0_9, %c0_10] : memref<2x4xf32, #tpu.memory_space<vmem>>, vector<2x4xf32>
      %cst_11 = arith.constant 3.906250e-03 : f32
      %12 = vector.broadcast %cst_11 : f32 to vector<2x4xf32>
      %13 = arith.mulf %11, %12 : vector<2x4xf32>
      %c0_12 = arith.constant 0 : index
      %c0_13 = arith.constant 0 : index
      %14 = vector.load %arg3[%c0_12, %c0_13] : memref<4x8xf32, #tpu.memory_space<vmem>>, vector<4x8xf32>
      %cst_14 = arith.constant dense<0.000000e+00> : vector<2x8xf32>
      %15 = tpu.matmul %13, %14, %cst_14 {dimension_numbers = #tpu.dot_dimension_numbers<[1], [0], [0], [1], [0, 0, 1, 1], [], []>} : vector<2x4xf32>, vector<4x8xf32>, vector<2x8xf32> -> vector<2x8xf32>
      %c0_15 = arith.constant 0 : index
      %c0_16 = arith.constant 0 : index
      %16 = vector.load %arg4[%c0_15, %c0_16] : memref<1x8xf32, #tpu.memory_space<vmem>>, vector<1x8xf32>
      %17 = vector.broadcast %16 : vector<1x8xf32> to vector<2x8xf32>
      %18 = arith.addf %15, %17 : vector<2x8xf32>
      %c0_17 = arith.constant 0 : index
      %c0_18 = arith.constant 0 : index
      %19 = vector.load %arg5[%c0_17, %c0_18] : memref<2x8xf32, #tpu.memory_space<vmem>>, vector<2x8xf32>
      tpu.vector_store %arg5[%c0_17, %c0_18], %18 {strides = array<i32>} : memref<2x8xf32, #tpu.memory_space<vmem>>, vector<2x8xf32>,
    } else {
    }
    return
  }
  func.func @transform_0(%arg0: i32, %arg1: i32) -> (i32, i32, i32) {
    %c0_i32 = arith.constant 0 : i32
    %c0_i32_0 = arith.constant 0 : i32
    return %arg0, %c0_i32, %arg1 : i32, i32, i32
  }
  func.func @transform_1(%arg0: i32, %arg1: i32) -> (i32, i32) {
    %c0_i32 = arith.constant 0 : i32
    %c0_i32_0 = arith.constant 0 : i32
    %c0_i32_1 = arith.constant 0 : i32
    return %c0_i32, %c0_i32_0 : i32, i32
  }
  func.func @transform_2(%arg0: i32, %arg1: i32) -> (i32, i32) {
    %c0_i32 = arith.constant 0 : i32
    %c0_i32_0 = arith.constant 0 : i32
    %c0_i32_1 = arith.constant 0 : i32
    return %c0_i32, %c0_i32_0 : i32, i32
  }
  func.func @transform_3(%arg0: i32, %arg1: i32) -> (i32, i32) {
    %c0_i32 = arith.constant 0 : i32
    %c0_i32_0 = arith.constant 0 : i32
    return %arg0, %c0_i32 : i32, i32
  }
}

</mosaic_0001>

<llo_original>
// kernel: classify_forward.1
$region0: #{classify_forward.1}
  #allocation0 [shape = 'u32[]', space=smem, size = 0x4, offset = 0x4, fixed_abs, tag = 'smem constant byte address 0x4 - core index']
  #allocation1 [shape = 'u32[144,128]{1,0:T(1,128)}', space=vmem, size = 0x12000, scoped, tag = 'internal scratch']
  #allocation2 [shape = 'f32[2,4]{1,0:T(2,128)}', space=vmem, size = 0x400, scoped, tag = 'scratch operand']
  %s0 = inlined_call_operand.vmem [shape: f32[2,4,256], index: 0, kind: input, shape index: {}]
  %s1 = inlined_call_operand.vmem [shape: f32[4,8], index: 1, kind: input, shape index: {}]
  %s2 = inlined_call_operand.vmem [shape: f32[1,8], index: 2, kind: input, shape index: {}]
  %s3 = inlined_call_operand.hbm [shape: f32[2,8], index: 3, kind: output, shape index: {}]
  %s4 = sld [smem:[#allocation0]]
  $region30: #{classify_forward.1} parent=0
    _
  %s6 = ssub.s32 1, %s4
  %s7 = scalar_select 0, %s6, %s4
  $region1: #{classify_forward.1} parent=0
    #allocation3 [shape = 'u8[1024]{0}', space=vmem, size = 0x400, scoped, tag = 'output window, operand 0, single buffered']
    #allocation4 [shape = 's32[1]{0}', space=sflag, size = 0x4, scoped, tag = 'scoped memory for classify_forward.1']
    %8 = vsyncpa [#allocation4], 0
    // Predicated region
    $region2: #{classify_forward.1} parent=1 // pred_check
      _
    $region3: #{classify_forward.1} parent=1 // pred_check_branch
      %10 = sbr.rel (0) target = $region5
    $region4: #{classify_forward.1} parent=1 // pred_region
      _
    $region5: #{classify_forward.1} parent=1 // pred_fallthru
      _
    // Predicated region
    $region6: #{classify_forward.1} parent=1 // pred_check
      _
    $region7: #{classify_forward.1} parent=1 // pred_check_branch
      %12 = sbr.rel (0) target = $region9
    $region8: #{classify_forward.1} parent=1 // pred_region
      _
    $region9: #{classify_forward.1} parent=1 // pred_fallthru
      _
    // Predicated region
    $region10: #{classify_forward.1} parent=1 // pred_check
      _
    $region11: #{classify_forward.1} parent=1 // pred_check_branch
      %14 = sbr.rel (0) target = $region13
    $region12: #{classify_forward.1} parent=1 // pred_region
      _
    $region13: #{classify_forward.1} parent=1 // pred_fallthru
      _
    %p15 = scmp.eq.s32.totalorder 0, 0
    // Predicated region
    $region14: #{classify_forward.1} parent=1 // pred_check
      %p16 = pneg %p15
    $region15: #{classify_forward.1} parent=1 // pred_check_branch
      %18 = sbr.rel (%p16) target = $region17
    $region16: #{classify_forward.1} parent=1 // pred_region
      %vm19 = vcmask 25600
      %20 = vst.msk [vmem:[#allocation2] sm:$0x3] %vm19, 0.0
    $region17: #{classify_forward.1} parent=1 // pred_fallthru
      _
    %v21 = vld [vmem:[#allocation2] sm:$0x3]
    %v22 = vld [vmem:[%s0] sm:$0xff]
    %v23 = vld [vmem:[%s0 + $0x8] sm:$0xff]
    %v26 = vcombine.high %v22, %v22
    %v27 = vcombine.high %v23, %v23
    %vm30 = vcmask 1043456
    %v31 = vsel %vm30, %v22, 0.0
    %v32 = vsel %vm30, %v26, 0.0
    %v33 = vadd.f32 %v31, %v32
    %34 = vadd.xlane.f32.xlu0 %v33
    %v35 = vpop.xlane.xlu0 %34
    %v36 = vsel %vm30, %v23, 0.0
    %v37 = vsel %vm30, %v27, 0.0
    %v38 = vadd.f32 %v36, %v37
    %39 = vadd.xlane.f32.xlu0 %v38
    %v40 = vpop.xlane.xlu0 %39
    %v43 = vlaneseq
    %v44 = vand.u32 %v43, 127
    %v45 = vlaneseq
    %v46 = vshrl.u32 %v45, 7
    %v47 = vsub.s32 %v44, %v46
    %v48 = vrot.slane %v35, %v47
    %v49 = vlaneseq
    %v50 = vshrl.u32 %v49, 7
    %v51 = vsub.s32 %v44, %v50
    %v52 = vrot.slane %v40, %v51
    %vm53 = vcmask 1041409
    %v54 = vsel %vm53, %v52, %v48
    %v56 = vadd.f32 %v21, %v54
    %vm57 = vcmask 25600
    %58 = vst.msk [vmem:[#allocation2] sm:$0x3] %vm57, %v56
    // Predicated region
    $region18: #{classify_forward.1} parent=1 // pred_check
      %p59 = pneg %p15
    $region19: #{classify_forward.1} parent=1 // pred_check_branch
      %61 = sbr.rel (%p59) target = $region21
    $region20: #{classify_forward.1} parent=1 // pred_region
      %v62 = vld [vmem:[#allocation2] sm:$0x3]
      %v63 = vmul.f32 %v62, 0.00390625
      %v64 = vld [vmem:[%s1] sm:$0xf]
      %v65 = vld [vmem:[%s2] sm:$0x1]
      %v67 = vlaneseq
      %v68 = vshrl.u32 %v67, 7
      %v69 = vsub.s32 0, %v68
      %v70 = vrot.slane %v65, %v69
      %vm72 = vcmask 31744
      %v74 = vsel %vm72, %v63, 0
      %v77 = vsel %vm30, %v64, 0
      %79 = vmatprep.subr.mxu0 0.0
      %80 = vmatpush1.msra.mxu0 %v77
      %81 = vmatprep.subr.mxu0 0.0
      %82 = vmatpush1.msra.mxu0 0.0
      %83 = vmatprep.subr.mxu0 0.0
      %84 = vmatpush1.msra.mxu0 0.0
      %85 = vmatprep.subr.mxu0 0.0
      %86 = vmatpush1.msra.mxu0 0.0
      %87 = vmatprep.subr.mxu0 0.0
      %88 = vmatpush1.msra.mxu0 0.0
      %89 = vmatprep.subr.mxu0 0.0
      %90 = vmatpush1.msra.mxu0 0.0
      %91 = vmatprep.subr.mxu0 0.0
      %92 = vmatpush1.msra.mxu0 0.0
      %93 = vmatprep.subr.mxu0 0.0
      %94 = vmatpush1.msra.mxu0 0.0
      %95 = vmatprep.subr.mxu0 0.0
      %96 = vmatpush1.msra.mxu0 0.0
      %97 = vmatprep.subr.mxu0 0.0
      %98 = vmatpush1.msra.mxu0 0.0
      %99 = vmatprep.subr.mxu0 0.0
      %100 = vmatpush1.msra.mxu0 0.0
      %101 = vmatprep.subr.mxu0 0.0
      %102 = vmatpush1.msra.mxu0 0.0
      %103 = vmatprep.subr.mxu0 0.0
      %104 = vmatpush1.msra.mxu0 0.0
      %105 = vmatprep.subr.mxu0 0.0
      %106 = vmatpush1.msra.mxu0 0.0
      %107 = vmatprep.subr.mxu0 0.0
      %108 = vmatpush1.msra.mxu0 0.0
      %109 = vmatprep.subr.mxu0 0.0
      %110 = vmatpush1.msra.mxu0 0.0
      %111 = vmatprep.subr.mxu0 0.0
      %112 = vmatpush1.msra.mxu0 0.0
      %113 = vmatprep.subr.mxu0 0.0
      %114 = vmatpush1.msra.mxu0 0.0
      %115 = vmatprep.subr.mxu0 0.0
      %116 = vmatpush1.msra.mxu0 0.0
      %117 = vmatprep.subr.mxu0 0.0
      %118 = vmatpush1.msra.mxu0 0.0
      %119 = vmatprep.subr.mxu0 0.0
      %120 = vmatpush1.msra.mxu0 0.0
      %121 = vmatprep.subr.mxu0 0.0
      %122 = vmatpush1.msra.mxu0 0.0
      %123 = vmatprep.subr.mxu0 0.0
      %124 = vmatpush1.msra.mxu0 0.0
      %125 = vmatprep.subr.mxu0 0.0
      %126 = vmatpush1.msra.mxu0 0.0
      %127 = vmatprep.subr.mxu0 0.0
      %128 = vmatpush1.msra.mxu0 0.0
      %129 = vmatprep.subr.mxu0 0.0
      %130 = vmatpush1.msra.mxu0 0.0
      %131 = vmatprep.subr.mxu0 0.0
      %132 = vmatpush1.msra.mxu0 0.0
      %133 = vmatprep.subr.mxu0 0.0
      %134 = vmatpush1.msra.mxu0 0.0
      %135 = vmatprep.subr.mxu0 0.0
      %136 = vmatpush1.msra.mxu0 0.0
      %137 = vmatprep.subr.mxu0 0.0
      %138 = vmatpush1.msra.mxu0 0.0
      %139 = vmatprep.subr.mxu0 0.0
      %140 = vmatpush1.msra.mxu0 0.0
      %141 = vmatprep.subr.mxu0 0.0
      %142 = vmatpush1.msra.mxu0 0.0
      %143 = vmatprep.mubr.f32.mxu0 0.0
      %144 = vmatmul.mubr.f32.gmra.mrb[0].mxu0 %v74
      %v145 = vpop.f32.mrb[0].mxu0
      %v146 = vadd.f32 %v70, %v145
      %v147 = vpop.f32.mrb[0].mxu0
      %148 = vdwg.mxu0
      %vm149 = vcmask 58368
      %150 = vst.msk [vmem:[#allocation3] sm:$0x3] %vm149, %v146
    $region21: #{classify_forward.1} parent=1 // pred_fallthru
      _
    // Predicated region
    $region22: #{classify_forward.1} parent=1 // pred_check
      _
    $region23: #{classify_forward.1} parent=1 // pred_check_branch
      %152 = sbr.rel (0) target = $region25
    $region24: #{classify_forward.1} parent=1 // pred_region
      %s154 = ssub.s32 32, 32
      %155 = vsyncadd [#allocation4], %s154
      %s157 = sshll.u32 [#allocation3], 4
      %s158 = int_to_ptr.vmem [resolvable:$true] %s157
      %160 = dma.vmem_to_hbm [thread:$0]  %s158, 32, %s3, [#allocation4]
    $region25: #{classify_forward.1} parent=1 // pred_fallthru
      _
    // Predicated region
    $region26: #{classify_forward.1} parent=1 // pred_check
      _
    $region27: #{classify_forward.1} parent=1 // pred_check_branch
      %162 = sbr.rel (0) target = $region29
    $region28: #{classify_forward.1} parent=1 // pred_region
      %163 = dma.done [#allocation4], 32
    $region29: #{classify_forward.1} parent=1 // pred_fallthru
      _
    %164 = vsyncpa [#allocation4], 1

</llo_original>
